<compile_context>
chip_gen: v7x
topology: tpu7x:2x2x1
jax: 0.10.0
libtpu: 0.0.40
codegen_flags: <defaults>
</compile_context>

<pallas_src>
import jax
import jax.numpy as jnp
from jax.experimental import pallas as pl
from jax.experimental.pallas import tpu as pltpu


# ----------------------------- kernel body ---------------------------------


def _hswish_kernel(x_ref, o_ref):
    x = x_ref[...]
    # bf16-native math on bf16 inputs (saves casts / vreg pressure on v6e/v7x);
    # everything else upcasts to f32.
    cdtype = jnp.bfloat16 if x.dtype == jnp.bfloat16 else jnp.float32
    xc = x.astype(cdtype)
    three = jnp.asarray(3.0, cdtype)
    six = jnp.asarray(6.0, cdtype)
    sixth = jnp.asarray(1.0 / 6.0, cdtype)
    r6 = jnp.clip(xc + three, jnp.asarray(0.0, cdtype), six)  # relu6(x + 3)
    o_ref[...] = (xc * r6 * sixth).astype(o_ref.dtype)


# ------------------------------ tuning knobs --------------------------------

# Prefer the widest lane dim that divides the flat size (lane-dense vst stream).
_LANE_CANDIDATES = (2048, 1024, 512, 256, 128)


def _sublane_multiple(dtype) -> int:
    itemsize = jnp.dtype(dtype).itemsize
    return {4: 8, 2: 16, 1: 32}.get(itemsize, 8)


def _round_up(a: int, b: int) -> int:
    return ((a + b - 1) // b) * b


def _device_tuning():
    """(target block bytes, scoped vmem limit bytes) for the local TPU."""
    block_bytes = 2 * 1024 * 1024          # safe default (v5e / unknown)
    vmem_limit = 32 * 1024 * 1024
    try:
        kind = jax.devices()[0].device_kind.lower()
    except Exception:
        kind = ""
    if "v6" in kind:
        # 128 MiB physical VMEM -> plenty of headroom for bigger streaming tiles.
        block_bytes = 4 * 1024 * 1024
        vmem_limit = 64 * 1024 * 1024
    elif "v7" in kind:
        # 64 MiB physical per TC, ~3.2 TB/s HBM -> bigger blocks amortize the
        # ~0.35us per-step overhead; keep footprint well under 64 MiB.
        block_bytes = 4 * 1024 * 1024
        vmem_limit = 48 * 1024 * 1024
    return block_bytes, vmem_limit


def _pick_tile_rows(rows: int, lanes: int, itemsize: int, sub: int,
                    block_bytes: int) -> int:
    """Row-block size: big enough to stream, small enough for >=~8 grid steps."""
    if rows <= sub:
        return rows  # full-rows block (exempt from the sublane-multiple rule)
    target = max(sub, block_bytes // (lanes * itemsize))
    tile = max(sub, (target // sub) * sub)
    # Keep at least ~8 grid steps so DMA/compute/writeback overlap and the
    # "parallel" axis has work for both TensorCores on v7x.
    min_steps_tile = _round_up(pl.cdiv(rows, 8), sub)
    tile = min(tile, min_steps_tile)
    tile = min(tile, _round_up(rows, sub))
    return max(sub, tile)


# ------------------------------ pallas_call ---------------------------------


def _make_in_spec(block_shape, index_map, buffer_count=None):
    if buffer_count is not None:
        try:
            return pl.BlockSpec(block_shape, index_map,
                                pipeline_mode=pl.Buffered(buffer_count))
        except TypeError:
            pass  # older BlockSpec signature: fall back to default 2-deep
    return pl.BlockSpec(block_shape, index_map)


def _run_2d(x2d, tile_rows: int, lanes: int, vmem_limit: int,
            donate: bool, deep_buffer: bool):
    rows = x2d.shape[0]
    grid = (pl.cdiv(rows, tile_rows),)  # partial last block: OOB writes masked
    in_spec = _make_in_spec((tile_rows, lanes), lambda i: (i, 0),
                            3 if deep_buffer else None)
    out_spec = pl.BlockSpec((tile_rows, lanes), lambda i: (i, 0))
    extra = {"input_output_aliases": {0: 0}} if donate else {}
    return pl.pallas_call(
        _hswish_kernel,
        out_shape=jax.ShapeDtypeStruct(x2d.shape, x2d.dtype),
        grid_spec=pltpu.PrefetchScalarGridSpec(
            num_scalar_prefetch=0,
            grid=grid,
            in_specs=[in_spec],
            out_specs=out_spec,
        ),
        compiler_params=pltpu.CompilerParams(
            dimension_semantics=("parallel",),
            vmem_limit_bytes=vmem_limit,
        ),
        **extra,
    )(x2d)


# ------------------------------- public API ---------------------------------


def hswish(x: jax.Array, *, donate: bool = False) -> jax.Array:
    """HSwish: x * relu6(x + 3) / 6, elementwise, any shape (e.g. NCHW).

    donate=True aliases the input buffer into the output (only on the aligned
    fast path); use only if the caller no longer needs `x`.
    """
    orig_shape = x.shape
    dtype = x.dtype
    total = x.size
    if total == 0:
        return x

    sub = _sublane_multiple(dtype)
    itemsize = jnp.dtype(dtype).itemsize
    block_bytes, vmem_limit = _device_tuning()

    # Fast path: flat size divisible by some lane width. No padding needed —
    # a partial last row-block is handled by the cdiv grid + masked writes.
    lanes = None
    for cand in _LANE_CANDIDATES:
        if total % cand == 0:
            lanes = cand
            break

    if lanes is not None:
        rows = total // lanes
        x2d = x.reshape(rows, lanes)
        tile_rows = _pick_tile_rows(rows, lanes, itemsize, sub, block_bytes)
        grid_len = pl.cdiv(rows, tile_rows)
        out2d = _run_2d(x2d, tile_rows, lanes, vmem_limit,
                        donate=donate, deep_buffer=grid_len >= 4)
        return out2d.reshape(orig_shape)

    # Ragged path (total % 128 != 0): aligned bulk through the Pallas kernel,
    # tiny (<128 element) tail in plain JAX. No full-tensor pad/trim copies.
    # TODO(synk): donate=True is ignored here (bulk + tail are reassembled).
    lanes = 128
    bulk = (total // lanes) * lanes
    x_flat = x.reshape(-1)
    parts = []
    if bulk:
        rows = bulk // lanes
        x2d = jax.lax.slice(x_flat, (0,), (bulk,)).reshape(rows, lanes)
        tile_rows = _pick_tile_rows(rows, lanes, itemsize, sub, block_bytes)
        grid_len = pl.cdiv(rows, tile_rows)
        parts.append(
            _run_2d(x2d, tile_rows, lanes, vmem_limit,
                    donate=False, deep_buffer=grid_len >= 4).reshape(-1))
    tail = x_flat[bulk:]
    if tail.size:
        tf = tail.astype(jnp.float32)
        parts.append((tf * jnp.clip(tf + 3.0, 0.0, 6.0) * (1.0 / 6.0)).astype(dtype))
    return jnp.concatenate(parts).reshape(orig_shape)


# --------------------------------- smoke test --------------------------------


if __name__ == "__main__":
    key = jax.random.PRNGKey(0)
    # NCHW, matching the PyTorch conv-style layout the module is used with.
    x = jax.random.normal(key, (2, 4, 16, 16), dtype=jnp.float32) * 4.0

    y = jax.block_until_ready(hswish(x))

    # Reference (pure JAX) check against x * relu6(x + 3) / 6.
    y_ref = x * jnp.clip(x + 3.0, 0.0, 6.0) / 6.0
    assert y.shape == x.shape and y.dtype == x.dtype
    assert jnp.allclose(y, y_ref, atol=1e-6, rtol=1e-6)

    print("KERNEL_OK")
</pallas_src>

<mosaic_0001>
module attributes {stable_mosaic.version = 11 : i64} {
  func.func @_hswish_kernel(%arg0: i32, %arg1: memref<1x2048xf32, #tpu.memory_space<vmem>>, %arg2: memref<1x2048xf32, #tpu.memory_space<vmem>>) attributes {dimension_semantics = [#tpu.dimension_semantics<parallel>], iteration_bounds = array<i64: 1>, scalar_prefetch = 0 : i64, scratch_operands = 0 : i64, tpu.core_type = #tpu.core_type<tc>, window_params = [{transform_indices = @transform_0, window_bounds = array<i64: 1, 2048>}, {transform_indices = @transform_1, window_bounds = array<i64: 1, 2048>}]} {
    %c0 = arith.constant 0 : index
    %c0_0 = arith.constant 0 : index
    %0 = vector.load %arg1[%c0, %c0_0] : memref<1x2048xf32, #tpu.memory_space<vmem>>, vector<1x2048xf32>
    %cst = arith.constant 3.000000e+00 : f32
    %1 = vector.broadcast %cst : f32 to vector<1x2048xf32>
    %2 = arith.addf %0, %1 : vector<1x2048xf32>
    %cst_1 = arith.constant 0.000000e+00 : f32
    %cst_2 = arith.constant 6.000000e+00 : f32
    %3 = vector.broadcast %cst_1 : f32 to vector<1x2048xf32>
    %4 = arith.maximumf %3, %2 : vector<1x2048xf32>
    %5 = vector.broadcast %cst_2 : f32 to vector<1x2048xf32>
    %6 = arith.minimumf %5, %4 : vector<1x2048xf32>
    %7 = arith.mulf %0, %6 : vector<1x2048xf32>
    %cst_3 = arith.constant 0.166666672 : f32
    %8 = vector.broadcast %cst_3 : f32 to vector<1x2048xf32>
    %9 = arith.mulf %7, %8 : vector<1x2048xf32>
    %c0_4 = arith.constant 0 : index
    %c0_5 = arith.constant 0 : index
    %10 = vector.load %arg2[%c0_4, %c0_5] : memref<1x2048xf32, #tpu.memory_space<vmem>>, vector<1x2048xf32>
    tpu.vector_store %arg2[%c0_4, %c0_5], %9 {strides = array<i32>} : memref<1x2048xf32, #tpu.memory_space<vmem>>, vector<1x2048xf32>,
    return
  }
  func.func @transform_0(%arg0: i32) -> (i32, i32) {
    %c0_i32 = arith.constant 0 : i32
    %c0_i32_0 = arith.constant 0 : i32
    return %arg0, %c0_i32 : i32, i32
  }
  func.func @transform_1(%arg0: i32) -> (i32, i32) {
    %c0_i32 = arith.constant 0 : i32
    %c0_i32_0 = arith.constant 0 : i32
    return %arg0, %c0_i32 : i32, i32
  }
}

</mosaic_0001>

<llo_original>
// kernel: tpu_custom_call.1
$region0: #{tpu_custom_call.1}
  #allocation0 [shape = 'u32[]', space=smem, size = 0x4, offset = 0x4, fixed_abs, tag = 'smem constant byte address 0x4 - core index']
  #allocation1 [shape = 'u32[144,128]{1,0:T(1,128)}', space=vmem, size = 0x12000, scoped, tag = 'internal scratch']
  %s0 = inlined_call_operand.hbm [shape: f32[1,2048], index: 0, kind: input, shape index: {}]
  %s1 = inlined_call_operand.hbm [shape: f32[1,2048], index: 1, kind: output, shape index: {}]
  %s2 = sld [smem:[#allocation0]]
  $region18: #{tpu_custom_call.1} parent=0
    _
  %s4 = ssub.s32 1, %s2
  %s5 = scalar_select 0, %s4, %s2
  $region1: #{tpu_custom_call.1} parent=0
    #allocation2 [shape = 'u8[8192]{0}', space=vmem, size = 0x2000, scoped, tag = 'input window, operand 0, single buffered']
    #allocation3 [shape = 's32[1]{0}', space=sflag, size = 0x4, scoped, tag = 'scoped memory for tpu_custom_call.1']
    #allocation4 [shape = 's32[1]{0}', space=sflag, size = 0x4, scoped, tag = 'scoped memory for tpu_custom_call.1']
    #allocation5 [shape = 'u8[8192]{0}', space=vmem, size = 0x2000, scoped, tag = 'output window, operand 0, single buffered']
    %6 = vsyncpa [#allocation3], 0
    %7 = vsyncpa [#allocation4], 0
    // Predicated region
    $region2: #{tpu_custom_call.1} parent=1 // pred_check
      _
    $region3: #{tpu_custom_call.1} parent=1 // pred_check_branch
      %9 = sbr.rel (0) target = $region5
    $region4: #{tpu_custom_call.1} parent=1 // pred_region
      %s11 = ssub.s32 256, 256
      %12 = vsyncadd [#allocation3], %s11
      %s14 = sshll.u32 [#allocation2], 4
      %s15 = int_to_ptr.vmem [resolvable:$true] %s14
      %17 = dma.hbm_to_vmem [thread:$0]  %s0, 256, %s15, [#allocation3]
    $region5: #{tpu_custom_call.1} parent=1 // pred_fallthru
      _
    // Predicated region
    $region6: #{tpu_custom_call.1} parent=1 // pred_check
      _
    $region7: #{tpu_custom_call.1} parent=1 // pred_check_branch
      %19 = sbr.rel (0) target = $region9
    $region8: #{tpu_custom_call.1} parent=1 // pred_region
      %20 = dma.done [#allocation3], 256
    $region9: #{tpu_custom_call.1} parent=1 // pred_fallthru
      _
    %v21 = vld [vmem:[#allocation2] sm:$0xff]
    %v22 = vld [vmem:[#allocation2 + $0x8] sm:$0xff]
    %v23 = vadd.f32 %v21, 3.0
    %v24 = vadd.f32 %v22, 3.0
    %v25 = vmax.f32 %v23, 0.0
    %v26 = vmax.f32 %v24, 0.0
    %v27 = vmin.f32 %v25, 6.0
    %v28 = vmin.f32 %v26, 6.0
    %v29 = vmul.f32 %v21, %v27
    %v30 = vmul.f32 %v22, %v28
    %v31 = vmul.f32 %v29, 0.16666667
    %v32 = vmul.f32 %v30, 0.16666667
    %33 = vst [vmem:[#allocation5] sm:$0xff] %v31
    %34 = vst [vmem:[#allocation5 + $0x8] sm:$0xff] %v32
    // Predicated region
    $region10: #{tpu_custom_call.1} parent=1 // pred_check
      _
    $region11: #{tpu_custom_call.1} parent=1 // pred_check_branch
      %36 = sbr.rel (0) target = $region13
    $region12: #{tpu_custom_call.1} parent=1 // pred_region
      %s38 = ssub.s32 256, 256
      %39 = vsyncadd [#allocation4], %s38
      %s41 = sshll.u32 [#allocation5], 4
      %s42 = int_to_ptr.vmem [resolvable:$true] %s41
      %44 = dma.vmem_to_hbm [thread:$0]  %s42, 256, %s1, [#allocation4]
    $region13: #{tpu_custom_call.1} parent=1 // pred_fallthru
      _
    // Predicated region
    $region14: #{tpu_custom_call.1} parent=1 // pred_check
      _
    $region15: #{tpu_custom_call.1} parent=1 // pred_check_branch
      %46 = sbr.rel (0) target = $region17
    $region16: #{tpu_custom_call.1} parent=1 // pred_region
      %47 = dma.done [#allocation4], 256
    $region17: #{tpu_custom_call.1} parent=1 // pred_fallthru
      _
    %48 = vsyncpa [#allocation3], 1
    %49 = vsyncpa [#allocation4], 1

</llo_original>
